<compile_context>
chip_gen: v7x
topology: tpu7x:2x2x1
jax: 0.10.0
libtpu: 0.0.40
codegen_flags: <defaults>
</compile_context>

<pallas_src>
import jax
import jax.numpy as jnp
from jax import lax
from jax.experimental import pallas as pl
from jax.experimental.pallas import tpu as pltpu

E = 300    # embedding_size == GRU input_size (fixed by the module)
H = 80     # GRU hidden_size (fixed by the module)
HP = 128   # per-gate width padded to one full lane tile


def bigru_recurrence_kernel(gx_ref,            # (T, bb, 6*HP) f32  fused gate pre-acts
                            whf_ref, whb_ref,  # (HP, 3*HP) bf16    fused hidden weights
                            bhnf_ref, bhnb_ref,  # (1, HP) f32      n-gate hidden biases
                            wfc_ref, bfc_ref,  # (4*HP, C) f32, (1, C) f32
                            out_ref):          # (bb, C) f32
    T, bb, _ = gx_ref.shape

    # Hoist the n-gate hidden-bias broadcasts out of the serial loop.
    bhn_f = jnp.broadcast_to(bhnf_ref[...], (bb, HP))
    bhn_b = jnp.broadcast_to(bhnb_ref[...], (bb, HP))

    def gru_step(gx_t, h, wh_ref, bhn):
        # Single fused (bb, HP) @ (HP, 3*HP) bf16 matmul for all 3 gates.
        gh = jnp.dot(h.astype(jnp.bfloat16), wh_ref[...],
                     preferred_element_type=jnp.float32)        # (bb, 3*HP) f32
        r = jax.nn.sigmoid(gx_t[:, 0:HP] + gh[:, 0:HP])
        z = jax.nn.sigmoid(gx_t[:, HP:2 * HP] + gh[:, HP:2 * HP])
        n = jnp.tanh(gx_t[:, 2 * HP:3 * HP] + r * (gh[:, 2 * HP:3 * HP] + bhn))
        return (1.0 - z) * n + z * h

    zeros = jnp.zeros((bb, HP), jnp.float32)
    neg_inf = jnp.full((bb, HP), -jnp.inf, jnp.float32)

    def body(t, carry):
        h_f, h_b, s_f, s_b, m_f, m_b = carry
        gx_f = gx_ref[t][:, 0:3 * HP]              # forward dir, time t
        gx_b = gx_ref[T - 1 - t][:, 3 * HP:6 * HP]  # backward dir, time T-1-t
        h_f = gru_step(gx_f, h_f, whf_ref, bhn_f)
        h_b = gru_step(gx_b, h_b, whb_ref, bhn_b)
        return (h_f, h_b,
                s_f + h_f, s_b + h_b,
                jnp.maximum(m_f, h_f), jnp.maximum(m_b, h_b))

    _, _, s_f, s_b, m_f, m_b = lax.fori_loop(
        0, T, body, (zeros, zeros, zeros, zeros, neg_inf, neg_inf))

    # Pooling + fused FC: [avg_fwd | avg_bwd | max_fwd | max_bwd], each padded
    # to 128 lanes (FC rows for the pad lanes are zero).
    inv_t = jnp.float32(1.0 / T)
    feat = jnp.concatenate([s_f * inv_t, s_b * inv_t, m_f, m_b], axis=-1)
    out_ref[...] = (jnp.dot(feat, wfc_ref[...],
                            preferred_element_type=jnp.float32)
                    + bfc_ref[...])


def _pick_batch_block(B):
    for cand in (256, 128, 64, 32, 16, 8):
        if B % cand == 0:
            return cand
    return B  # small / odd batches: single block (full dim is always legal)


def _pack_params(params):
    """Pad gates to 128 lanes, fuse gates (and directions for Wx), fold biases."""
    def pad_lane(w):
        return jnp.pad(w, [(0, 0)] * (w.ndim - 1) + [(0, HP - H)])

    def fuse_wx(w3):                       # (3, E, H) -> (E, 3*HP)
        wp = pad_lane(w3)
        return jnp.concatenate([wp[0], wp[1], wp[2]], axis=-1)

    def fuse_wh(w3):                       # (3, H, H) -> (HP, 3*HP)
        wp = pad_lane(w3)                                   # (3, H, HP)
        wp = jnp.pad(wp, ((0, 0), (0, HP - H), (0, 0)))     # (3, HP, HP)
        return jnp.concatenate([wp[0], wp[1], wp[2]], axis=-1)

    def fuse_bias(bx, bh):                 # -> (1, 3*HP): [bx_r+bh_r, bx_z+bh_z, bx_n]
        b = jnp.stack([bx[0] + bh[0], bx[1] + bh[1], bx[2]], axis=0)  # (3, 1, H)
        bp = pad_lane(b)
        return jnp.concatenate([bp[0], bp[1], bp[2]], axis=-1)

    wx_all = jnp.concatenate([fuse_wx(params['wx_f']),
                              fuse_wx(params['wx_b'])],
                             axis=-1).astype(jnp.bfloat16)            # (E, 6*HP)
    gbias_all = jnp.concatenate([fuse_bias(params['bx_f'], params['bh_f']),
                                 fuse_bias(params['bx_b'], params['bh_b'])],
                                axis=-1)                              # (1, 6*HP)
    wh_f = fuse_wh(params['wh_f']).astype(jnp.bfloat16)               # (HP, 3*HP)
    wh_b = fuse_wh(params['wh_b']).astype(jnp.bfloat16)
    bhn_f = pad_lane(params['bh_f'][2])                               # (1, HP)
    bhn_b = pad_lane(params['bh_b'][2])
    # FC rows ordered [avg_f, avg_b, max_f, max_b], each H rows padded to HP.
    wfc = jnp.concatenate(
        [jnp.pad(params['w_fc'][i], ((0, HP - H), (0, 0))) for i in range(4)],
        axis=0)                                                       # (4*HP, C)
    return wx_all, gbias_all, wh_f, wh_b, bhn_f, bhn_b, wfc, params['b_fc']


def bigru_forward(x_ids, params):
    B, T = x_ids.shape
    C = params['b_fc'].shape[-1]
    (wx_all, gbias_all, wh_f, wh_b,
     bhn_f, bhn_b, wfc, bfc) = _pack_params(params)

    # Embedding lookup (gather) as plain-JAX glue.
    x = jnp.take(params['embedding'], x_ids, axis=0)        # (B, T, E)
    # Dropout2d(p=0.2) is identity at inference time.
    # TODO(synk): train-mode spatial (per-channel) dropout not implemented.
    x_tm = jnp.transpose(x, (1, 0, 2))                      # (T, B, E)

    # Hoisted fused input-to-hidden projection for BOTH directions, one large
    # bf16 matmul (M = T*B, K = E, N = 6*HP) with f32 accumulation; the input
    # biases and additive b_hr / b_hz hidden biases are folded in here.
    gx = jnp.einsum('tbe,ef->tbf', x_tm.astype(jnp.bfloat16), wx_all,
                    preferred_element_type=jnp.float32)
    gx = gx + gbias_all.reshape(1, 1, 6 * HP)               # (T, B, 6*HP) f32

    bb = _pick_batch_block(B)                               # batch-parallel grid
    grid_spec = pltpu.PrefetchScalarGridSpec(
        num_scalar_prefetch=0,
        grid=(B // bb,),
        in_specs=[
            pl.BlockSpec((T, bb, 6 * HP), lambda i: (0, i, 0)),
            pl.BlockSpec((HP, 3 * HP), lambda i: (0, 0)),
            pl.BlockSpec((HP, 3 * HP), lambda i: (0, 0)),
            pl.BlockSpec((1, HP), lambda i: (0, 0)),
            pl.BlockSpec((1, HP), lambda i: (0, 0)),
            pl.BlockSpec((4 * HP, C), lambda i: (0, 0)),
            pl.BlockSpec((1, C), lambda i: (0, 0)),
        ],
        out_specs=pl.BlockSpec((bb, C), lambda i: (i, 0)),
    )
    # NOTE: for large T*B, raise vmem_limit_bytes and/or shrink bb so the
    # (T, bb, 6*HP) gx block fits the per-chip scoped VMEM budget.
    return pl.pallas_call(
        bigru_recurrence_kernel,
        out_shape=jax.ShapeDtypeStruct((B, C), jnp.float32),
        grid_spec=grid_spec,
        compiler_params=pltpu.CompilerParams(
            dimension_semantics=("parallel",)),
    )(gx, wh_f, wh_b, bhn_f, bhn_b, wfc, bfc)


def init_params(key, num_tokens, num_classes):
    ks = jax.random.split(key, 10)
    k_gru = 1.0 / (H ** 0.5)

    def u(k, shape, scale):
        return jax.random.uniform(k, shape, jnp.float32, -scale, scale)

    emb = jax.random.normal(ks[0], (num_tokens, E), jnp.float32)   # N(0, 1)
    wx_f = u(ks[1], (3, E, H), k_gru)
    wh_f = u(ks[2], (3, H, H), k_gru)
    bx_f = u(ks[3], (3, 1, H), k_gru)
    bh_f = u(ks[4], (3, 1, H), k_gru)
    wx_b = u(ks[5], (3, E, H), k_gru)
    wh_b = u(ks[6], (3, H, H), k_gru)
    bx_b = u(ks[7], (3, 1, H), k_gru)
    bh_b = u(ks[8], (3, 1, H), k_gru)
    # fc: xavier_uniform weight, zero bias (per BiGRU.init_param)
    fan_in, fan_out = 4 * H, num_classes
    limit = (6.0 / (fan_in + fan_out)) ** 0.5
    w_fc_full = jax.random.uniform(ks[9], (4 * H, num_classes), jnp.float32,
                                   -limit, limit)
    w_fc = w_fc_full.reshape(4, H, num_classes)
    b_fc = jnp.zeros((1, num_classes), jnp.float32)
    return dict(embedding=emb,
                wx_f=wx_f, wh_f=wh_f, bx_f=bx_f, bh_f=bh_f,
                wx_b=wx_b, wh_b=wh_b, bx_b=bx_b, bh_b=bh_b,
                w_fc=w_fc, b_fc=b_fc)


def reference_forward(x_ids, params):
    """Pure-JAX f32 reference for correctness check."""
    x = jnp.take(params['embedding'], x_ids, axis=0).astype(jnp.float32)  # (B,T,E)
    B = x.shape[0]

    def run_dir(x_seq, wx, wh, bx, bh):
        def step(h, x_t):
            r = jax.nn.sigmoid(x_t @ wx[0] + bx[0] + h @ wh[0] + bh[0])
            z = jax.nn.sigmoid(x_t @ wx[1] + bx[1] + h @ wh[1] + bh[1])
            n = jnp.tanh(x_t @ wx[2] + bx[2] + r * (h @ wh[2] + bh[2]))
            h_new = (1.0 - z) * n + z * h
            return h_new, h_new
        h0 = jnp.zeros((B, H), jnp.float32)
        _, outs = lax.scan(step, h0, jnp.transpose(x_seq, (1, 0, 2)))
        return outs  # (T, B, H)

    out_f = run_dir(x, params['wx_f'], params['wh_f'], params['bx_f'], params['bh_f'])
    out_b = run_dir(x[:, ::-1, :], params['wx_b'], params['wh_b'],
                    params['bx_b'], params['bh_b'])[::-1]
    out = jnp.concatenate([out_f, out_b], axis=-1)   # (T, B, 2H)
    avg = jnp.mean(out, axis=0)
    mx = jnp.max(out, axis=0)
    feat = jnp.concatenate([avg, mx], axis=-1)       # (B, 4H)
    return feat @ params['w_fc'].reshape(4 * H, -1) + params['b_fc']


if __name__ == "__main__":
    key = jax.random.PRNGKey(0)
    num_tokens, num_classes = 50, 4
    B, T = 2, 8

    kp, kx = jax.random.split(key)
    params = init_params(kp, num_tokens, num_classes)
    x_ids = jax.random.randint(kx, (B, T), 0, num_tokens, dtype=jnp.int32)

    logits = bigru_forward(x_ids, params)
    jax.block_until_ready(logits)

    ref = reference_forward(x_ids, params)
    assert logits.shape == (B, num_classes)
    # bf16 MXU operands (f32 accumulation / pointwise) => slightly wider tol.
    assert jnp.allclose(logits, ref, atol=2e-2, rtol=2e-2), \
        float(jnp.max(jnp.abs(logits - ref)))
    print("KERNEL_OK")
</pallas_src>

<mosaic_0001>
module attributes {stable_mosaic.version = 11 : i64} {
  func.func @bigru_recurrence_kernel(%arg0: i32, %arg1: memref<8x2x768xf32, #tpu.memory_space<vmem>>, %arg2: memref<128x384xbf16, #tpu.memory_space<vmem>>, %arg3: memref<128x384xbf16, #tpu.memory_space<vmem>>, %arg4: memref<1x128xf32, #tpu.memory_space<vmem>>, %arg5: memref<1x128xf32, #tpu.memory_space<vmem>>, %arg6: memref<512x4xf32, #tpu.memory_space<vmem>>, %arg7: memref<1x4xf32, #tpu.memory_space<vmem>>, %arg8: memref<2x4xf32, #tpu.memory_space<vmem>>) attributes {dimension_semantics = [#tpu.dimension_semantics<parallel>], iteration_bounds = array<i64: 1>, scalar_prefetch = 0 : i64, scratch_operands = 0 : i64, tpu.core_type = #tpu.core_type<tc>, window_params = [{transform_indices = @transform_0, window_bounds = array<i64: 8, 2, 768>}, {pipeline_mode = #tpu.pipeline_mode<synchronous>, transform_indices = @transform_1, window_bounds = array<i64: 128, 384>}, {pipeline_mode = #tpu.pipeline_mode<synchronous>, transform_indices = @transform_2, window_bounds = array<i64: 128, 384>}, {pipeline_mode = #tpu.pipeline_mode<synchronous>, transform_indices = @transform_3, window_bounds = array<i64: 1, 128>}, {pipeline_mode = #tpu.pipeline_mode<synchronous>, transform_indices = @transform_4, window_bounds = array<i64: 1, 128>}, {pipeline_mode = #tpu.pipeline_mode<synchronous>, transform_indices = @transform_5, window_bounds = array<i64: 512, 4>}, {pipeline_mode = #tpu.pipeline_mode<synchronous>, transform_indices = @transform_6, window_bounds = array<i64: 1, 4>}, {transform_indices = @transform_7, window_bounds = array<i64: 2, 4>}]} {
    %c0 = arith.constant 0 : index
    %c0_0 = arith.constant 0 : index
    %0 = vector.load %arg4[%c0, %c0_0] : memref<1x128xf32, #tpu.memory_space<vmem>>, vector<1x128xf32>
    %1 = vector.shape_cast %0 : vector<1x128xf32> to vector<1x128xf32>
    %2 = vector.broadcast %1 : vector<1x128xf32> to vector<2x128xf32>
    %c0_1 = arith.constant 0 : index
    %c0_2 = arith.constant 0 : index
    %3 = vector.load %arg5[%c0_1, %c0_2] : memref<1x128xf32, #tpu.memory_space<vmem>>, vector<1x128xf32>
    %4 = vector.shape_cast %3 : vector<1x128xf32> to vector<1x128xf32>
    %5 = vector.broadcast %4 : vector<1x128xf32> to vector<2x128xf32>
    %cst = arith.constant 0.000000e+00 : f32
    %6 = vector.broadcast %cst : f32 to vector<2x128xf32>
    %cst_3 = arith.constant 0xFF800000 : f32
    %7 = vector.broadcast %cst_3 : f32 to vector<2x128xf32>
    %c0_i32 = arith.constant 0 : i32
    %c8_i32 = arith.constant 8 : i32
    %8 = arith.addi %c0_i32, %c8_i32 : i32
    %c1_i32 = arith.constant 1 : i32
    %9:6 = scf.for %arg9 = %c0_i32 to %8 step %c1_i32 iter_args(%arg10 = %6, %arg11 = %6, %arg12 = %6, %arg13 = %6, %arg14 = %7, %arg15 = %7) -> (vector<2x128xf32>, vector<2x128xf32>, vector<2x128xf32>, vector<2x128xf32>, vector<2x128xf32>, vector<2x128xf32>)  : i32 {
      %21 = arith.index_cast %arg9 : i32 to index
      %c0_14 = arith.constant 0 : index
      %c0_15 = arith.constant 0 : index
      %22 = vector.load %arg1[%21, %c0_14, %c0_15] : memref<8x2x768xf32, #tpu.memory_space<vmem>>, vector<1x2x768xf32>
      %23 = vector.shape_cast %22 : vector<1x2x768xf32> to vector<2x768xf32>
      %24 = vector.extract_strided_slice %23 {offsets = [0, 0], sizes = [2, 384], strides = [1, 1]} : vector<2x768xf32> to vector<2x384xf32>
      %c7_i32 = arith.constant 7 : i32
      %25 = arith.subi %c7_i32, %arg9 : i32
      %26 = arith.index_cast %25 : i32 to index
      %c0_16 = arith.constant 0 : index
      %c0_17 = arith.constant 0 : index
      %27 = vector.load %arg1[%26, %c0_16, %c0_17] : memref<8x2x768xf32, #tpu.memory_space<vmem>>, vector<1x2x768xf32>
      %28 = vector.shape_cast %27 : vector<1x2x768xf32> to vector<2x768xf32>
      %29 = vector.extract_strided_slice %28 {offsets = [0, 384], sizes = [2, 384], strides = [1, 1]} : vector<2x768xf32> to vector<2x384xf32>
      %30 = arith.truncf %arg10 : vector<2x128xf32> to vector<2x128xbf16>
      %c0_18 = arith.constant 0 : index
      %c0_19 = arith.constant 0 : index
      %31 = vector.load %arg2[%c0_18, %c0_19] : memref<128x384xbf16, #tpu.memory_space<vmem>>, vector<128x384xbf16>
      %cst_20 = arith.constant dense<0.000000e+00> : vector<2x384xf32>
      %32 = tpu.matmul %30, %31, %cst_20 {dimension_numbers = #tpu.dot_dimension_numbers<[1], [0], [0], [1], [0, 0, 1, 1], [], []>} : vector<2x128xbf16>, vector<128x384xbf16>, vector<2x384xf32> -> vector<2x384xf32>
      %33 = vector.extract_strided_slice %24 {offsets = [0, 0], sizes = [2, 128], strides = [1, 1]} : vector<2x384xf32> to vector<2x128xf32>
      %34 = vector.extract_strided_slice %32 {offsets = [0, 0], sizes = [2, 128], strides = [1, 1]} : vector<2x384xf32> to vector<2x128xf32>
      %35 = arith.addf %33, %34 : vector<2x128xf32>
      %36 = arith.negf %35 : vector<2x128xf32>
      %37 = math.exp %36 : vector<2x128xf32>
      %cst_21 = arith.constant 1.000000e+00 : f32
      %38 = vector.broadcast %cst_21 : f32 to vector<2x128xf32>
      %39 = arith.addf %38, %37 : vector<2x128xf32>
      %40 = arith.divf %38, %39 : vector<2x128xf32>
      %41 = vector.extract_strided_slice %24 {offsets = [0, 128], sizes = [2, 128], strides = [1, 1]} : vector<2x384xf32> to vector<2x128xf32>
      %42 = vector.extract_strided_slice %32 {offsets = [0, 128], sizes = [2, 128], strides = [1, 1]} : vector<2x384xf32> to vector<2x128xf32>
      %43 = arith.addf %41, %42 : vector<2x128xf32>
      %44 = arith.negf %43 : vector<2x128xf32>
      %45 = math.exp %44 : vector<2x128xf32>
      %cst_22 = arith.constant 1.000000e+00 : f32
      %46 = vector.broadcast %cst_22 : f32 to vector<2x128xf32>
      %47 = arith.addf %46, %45 : vector<2x128xf32>
      %48 = arith.divf %46, %47 : vector<2x128xf32>
      %49 = vector.extract_strided_slice %24 {offsets = [0, 256], sizes = [2, 128], strides = [1, 1]} : vector<2x384xf32> to vector<2x128xf32>
      %50 = vector.extract_strided_slice %32 {offsets = [0, 256], sizes = [2, 128], strides = [1, 1]} : vector<2x384xf32> to vector<2x128xf32>
      %51 = arith.addf %50, %2 : vector<2x128xf32>
      %52 = arith.mulf %40, %51 : vector<2x128xf32>
      %53 = arith.addf %49, %52 : vector<2x128xf32>
      %54 = math.tanh %53 : vector<2x128xf32>
      %cst_23 = arith.constant 1.000000e+00 : f32
      %55 = vector.broadcast %cst_23 : f32 to vector<2x128xf32>
      %56 = arith.subf %55, %48 : vector<2x128xf32>
      %57 = arith.mulf %56, %54 : vector<2x128xf32>
      %58 = arith.mulf %48, %arg10 : vector<2x128xf32>
      %59 = arith.addf %57, %58 : vector<2x128xf32>
      %60 = arith.truncf %arg11 : vector<2x128xf32> to vector<2x128xbf16>
      %c0_24 = arith.constant 0 : index
      %c0_25 = arith.constant 0 : index
      %61 = vector.load %arg3[%c0_24, %c0_25] : memref<128x384xbf16, #tpu.memory_space<vmem>>, vector<128x384xbf16>
      %cst_26 = arith.constant dense<0.000000e+00> : vector<2x384xf32>
      %62 = tpu.matmul %60, %61, %cst_26 {dimension_numbers = #tpu.dot_dimension_numbers<[1], [0], [0], [1], [0, 0, 1, 1], [], []>} : vector<2x128xbf16>, vector<128x384xbf16>, vector<2x384xf32> -> vector<2x384xf32>
      %63 = vector.extract_strided_slice %29 {offsets = [0, 0], sizes = [2, 128], strides = [1, 1]} : vector<2x384xf32> to vector<2x128xf32>
      %64 = vector.extract_strided_slice %62 {offsets = [0, 0], sizes = [2, 128], strides = [1, 1]} : vector<2x384xf32> to vector<2x128xf32>
      %65 = arith.addf %63, %64 : vector<2x128xf32>
      %66 = arith.negf %65 : vector<2x128xf32>
      %67 = math.exp %66 : vector<2x128xf32>
      %cst_27 = arith.constant 1.000000e+00 : f32
      %68 = vector.broadcast %cst_27 : f32 to vector<2x128xf32>
      %69 = arith.addf %68, %67 : vector<2x128xf32>
      %70 = arith.divf %68, %69 : vector<2x128xf32>
      %71 = vector.extract_strided_slice %29 {offsets = [0, 128], sizes = [2, 128], strides = [1, 1]} : vector<2x384xf32> to vector<2x128xf32>
      %72 = vector.extract_strided_slice %62 {offsets = [0, 128], sizes = [2, 128], strides = [1, 1]} : vector<2x384xf32> to vector<2x128xf32>
      %73 = arith.addf %71, %72 : vector<2x128xf32>
      %74 = arith.negf %73 : vector<2x128xf32>
      %75 = math.exp %74 : vector<2x128xf32>
      %cst_28 = arith.constant 1.000000e+00 : f32
      %76 = vector.broadcast %cst_28 : f32 to vector<2x128xf32>
      %77 = arith.addf %76, %75 : vector<2x128xf32>
      %78 = arith.divf %76, %77 : vector<2x128xf32>
      %79 = vector.extract_strided_slice %29 {offsets = [0, 256], sizes = [2, 128], strides = [1, 1]} : vector<2x384xf32> to vector<2x128xf32>
      %80 = vector.extract_strided_slice %62 {offsets = [0, 256], sizes = [2, 128], strides = [1, 1]} : vector<2x384xf32> to vector<2x128xf32>
      %81 = arith.addf %80, %5 : vector<2x128xf32>
      %82 = arith.mulf %70, %81 : vector<2x128xf32>
      %83 = arith.addf %79, %82 : vector<2x128xf32>
      %84 = math.tanh %83 : vector<2x128xf32>
      %cst_29 = arith.constant 1.000000e+00 : f32
      %85 = vector.broadcast %cst_29 : f32 to vector<2x128xf32>
      %86 = arith.subf %85, %78 : vector<2x128xf32>
      %87 = arith.mulf %86, %84 : vector<2x128xf32>
      %88 = arith.mulf %78, %arg11 : vector<2x128xf32>
      %89 = arith.addf %87, %88 : vector<2x128xf32>
      %90 = arith.addf %arg12, %59 : vector<2x128xf32>
      %91 = arith.addf %arg13, %89 : vector<2x128xf32>
      %92 = arith.maximumf %arg14, %59 : vector<2x128xf32>
      %93 = arith.maximumf %arg15, %89 : vector<2x128xf32>
      scf.yield %59, %89, %90, %91, %92, %93 : vector<2x128xf32>, vector<2x128xf32>, vector<2x128xf32>, vector<2x128xf32>, vector<2x128xf32>, vector<2x128xf32>
    }
    %c8_i32_4 = arith.constant 8 : i32
    %cst_5 = arith.constant 1.250000e-01 : f32
    %10 = vector.broadcast %cst_5 : f32 to vector<2x128xf32>
    %11 = arith.mulf %9#2, %10 : vector<2x128xf32>
    %cst_6 = arith.constant 1.250000e-01 : f32
    %12 = vector.broadcast %cst_6 : f32 to vector<2x128xf32>
    %13 = arith.mulf %9#3, %12 : vector<2x128xf32>
    %14 = tpu.concatenate %11, %13, %9#4, %9#5 in 1 : vector<2x128xf32>, vector<2x128xf32>, vector<2x128xf32>, vector<2x128xf32> -> vector<2x512xf32>
    %c0_7 = arith.constant 0 : index
    %c0_8 = arith.constant 0 : index
    %15 = vector.load %arg6[%c0_7, %c0_8] : memref<512x4xf32, #tpu.memory_space<vmem>>, vector<512x4xf32>
    %cst_9 = arith.constant dense<0.000000e+00> : vector<2x4xf32>
    %16 = tpu.matmul %14, %15, %cst_9 {dimension_numbers = #tpu.dot_dimension_numbers<[1], [0], [0], [1], [0, 0, 1, 1], [], []>} : vector<2x512xf32>, vector<512x4xf32>, vector<2x4xf32> -> vector<2x4xf32>
    %c0_10 = arith.constant 0 : index
    %c0_11 = arith.constant 0 : index
    %17 = vector.load %arg7[%c0_10, %c0_11] : memref<1x4xf32, #tpu.memory_space<vmem>>, vector<1x4xf32>
    %18 = vector.broadcast %17 : vector<1x4xf32> to vector<2x4xf32>
    %19 = arith.addf %16, %18 : vector<2x4xf32>
    %c0_12 = arith.constant 0 : index
    %c0_13 = arith.constant 0 : index
    %20 = vector.load %arg8[%c0_12, %c0_13] : memref<2x4xf32, #tpu.memory_space<vmem>>, vector<2x4xf32>
    tpu.vector_store %arg8[%c0_12, %c0_13], %19 {strides = array<i32>} : memref<2x4xf32, #tpu.memory_space<vmem>>, vector<2x4xf32>,
    return
  }
  func.func @transform_0(%arg0: i32) -> (i32, i32, i32) {
    %c0_i32 = arith.constant 0 : i32
    %c0_i32_0 = arith.constant 0 : i32
    %c0_i32_1 = arith.constant 0 : i32
    return %c0_i32, %arg0, %c0_i32_0 : i32, i32, i32
  }
  func.func @transform_1(%arg0: i32) -> (i32, i32) {
    %c0_i32 = arith.constant 0 : i32
    %c0_i32_0 = arith.constant 0 : i32
    %c0_i32_1 = arith.constant 0 : i32
    return %c0_i32, %c0_i32_0 : i32, i32
  }
  func.func @transform_2(%arg0: i32) -> (i32, i32) {
    %c0_i32 = arith.constant 0 : i32
    %c0_i32_0 = arith.constant 0 : i32
    %c0_i32_1 = arith.constant 0 : i32
    return %c0_i32, %c0_i32_0 : i32, i32
  }
  func.func @transform_3(%arg0: i32) -> (i32, i32) {
    %c0_i32 = arith.constant 0 : i32
    %c0_i32_0 = arith.constant 0 : i32
    %c0_i32_1 = arith.constant 0 : i32
    return %c0_i32, %c0_i32_0 : i32, i32
  }
  func.func @transform_4(%arg0: i32) -> (i32, i32) {
    %c0_i32 = arith.constant 0 : i32
    %c0_i32_0 = arith.constant 0 : i32
    %c0_i32_1 = arith.constant 0 : i32
    return %c0_i32, %c0_i32_0 : i32, i32
  }
  func.func @transform_5(%arg0: i32) -> (i32, i32) {
    %c0_i32 = arith.constant 0 : i32
    %c0_i32_0 = arith.constant 0 : i32
    %c0_i32_1 = arith.constant 0 : i32
    return %c0_i32, %c0_i32_0 : i32, i32
  }
  func.func @transform_6(%arg0: i32) -> (i32, i32) {
    %c0_i32 = arith.constant 0 : i32
    %c0_i32_0 = arith.constant 0 : i32
    %c0_i32_1 = arith.constant 0 : i32
    return %c0_i32, %c0_i32_0 : i32, i32
  }
  func.func @transform_7(%arg0: i32) -> (i32, i32) {
    %c0_i32 = arith.constant 0 : i32
    %c0_i32_0 = arith.constant 0 : i32
    return %arg0, %c0_i32 : i32, i32
  }
}

</mosaic_0001>

<llo_original>
// kernel: tpu_custom_call.1
$region0: #{tpu_custom_call.1}
  #allocation0 [shape = 'u32[]', space=smem, size = 0x4, offset = 0x4, fixed_abs, tag = 'smem constant byte address 0x4 - core index']
  #allocation1 [shape = 'u32[144,128]{1,0:T(1,128)}', space=vmem, size = 0x12000, scoped, tag = 'internal scratch']
  %s0 = inlined_call_operand.vmem [shape: f32[8,2,768], index: 0, kind: input, shape index: {}]
  %s1 = inlined_call_operand.vmem [shape: bf16[128,384], index: 1, kind: input, shape index: {}]
  %s2 = inlined_call_operand.vmem [shape: bf16[128,384], index: 2, kind: input, shape index: {}]
  %s3 = inlined_call_operand.vmem [shape: f32[1,128], index: 3, kind: input, shape index: {}]
  %s4 = inlined_call_operand.vmem [shape: f32[1,128], index: 4, kind: input, shape index: {}]
  %s5 = inlined_call_operand.vmem [shape: f32[512,4], index: 5, kind: input, shape index: {}]
  %s6 = inlined_call_operand.vmem [shape: f32[1,4], index: 6, kind: input, shape index: {}]
  %s7 = inlined_call_operand.hbm [shape: f32[2,4], index: 7, kind: output, shape index: {}]
  %s8 = sld [smem:[#allocation0]]
  $region45: #{tpu_custom_call.1} parent=0
    _
  %s10 = ssub.s32 1, %s8
  %s11 = scalar_select 0, %s10, %s8
  $region1: #{tpu_custom_call.1} parent=0
    #allocation2 [shape = 'u8[1024]{0}', space=vmem, size = 0x400, scoped, tag = 'output window, operand 0, single buffered']
    #allocation3 [shape = 's32[1]{0}', space=sflag, size = 0x4, scoped, tag = 'scoped memory for tpu_custom_call.1']
    %12 = vsyncpa [#allocation3], 0
    // Predicated region
    $region2: #{tpu_custom_call.1} parent=1 // pred_check
      _
    $region3: #{tpu_custom_call.1} parent=1 // pred_check_branch
      %14 = sbr.rel (0) target = $region5
    $region4: #{tpu_custom_call.1} parent=1 // pred_region
      _
    $region5: #{tpu_custom_call.1} parent=1 // pred_fallthru
      _
    // Predicated region
    $region6: #{tpu_custom_call.1} parent=1 // pred_check
      _
    $region7: #{tpu_custom_call.1} parent=1 // pred_check_branch
      %16 = sbr.rel (0) target = $region9
    $region8: #{tpu_custom_call.1} parent=1 // pred_region
      _
    $region9: #{tpu_custom_call.1} parent=1 // pred_fallthru
      _
    // Predicated region
    $region10: #{tpu_custom_call.1} parent=1 // pred_check
      _
    $region11: #{tpu_custom_call.1} parent=1 // pred_check_branch
      %18 = sbr.rel (0) target = $region13
    $region12: #{tpu_custom_call.1} parent=1 // pred_region
      _
    $region13: #{tpu_custom_call.1} parent=1 // pred_fallthru
      _
    // Predicated region
    $region14: #{tpu_custom_call.1} parent=1 // pred_check
      _
    $region15: #{tpu_custom_call.1} parent=1 // pred_check_branch
      %20 = sbr.rel (0) target = $region17
    $region16: #{tpu_custom_call.1} parent=1 // pred_region
      _
    $region17: #{tpu_custom_call.1} parent=1 // pred_fallthru
      _
    // Predicated region
    $region18: #{tpu_custom_call.1} parent=1 // pred_check
      _
    $region19: #{tpu_custom_call.1} parent=1 // pred_check_branch
      %22 = sbr.rel (0) target = $region21
    $region20: #{tpu_custom_call.1} parent=1 // pred_region
      _
    $region21: #{tpu_custom_call.1} parent=1 // pred_fallthru
      _
    // Predicated region
    $region22: #{tpu_custom_call.1} parent=1 // pred_check
      _
    $region23: #{tpu_custom_call.1} parent=1 // pred_check_branch
      %24 = sbr.rel (0) target = $region25
    $region24: #{tpu_custom_call.1} parent=1 // pred_region
      _
    $region25: #{tpu_custom_call.1} parent=1 // pred_fallthru
      _
    // Predicated region
    $region26: #{tpu_custom_call.1} parent=1 // pred_check
      _
    $region27: #{tpu_custom_call.1} parent=1 // pred_check_branch
      %26 = sbr.rel (0) target = $region29
    $region28: #{tpu_custom_call.1} parent=1 // pred_region
      _
    $region29: #{tpu_custom_call.1} parent=1 // pred_fallthru
      _
    %v28 = vld [vmem:[%s3] sm:$0x1]
    %v30 = vlaneseq
    %v31 = vshrl.u32 %v30, 7
    %v32 = vsub.s32 0, %v31
    %v33 = vrot.slane %v28, %v32
    %v35 = vld [vmem:[%s4] sm:$0x1]
    %v37 = vlaneseq
    %v38 = vshrl.u32 %v37, 7
    %v39 = vsub.s32 0, %v38
    %v40 = vrot.slane %v35, %v39
    loop: start=0, step=1, limit=8
    $region30: #{tpu_custom_call.1} parent=1 // loop_pre_header
      _
    $region31: #{tpu_custom_call.1} parent=1 // loop_header
      %s43 = sphi 0, %s47
      %p44 = scmp.ge.s32.totalorder %s43, 8
      %v48 = vphi 0.0, %v332
      %v49 = vphi 0.0, %v602
      %v50 = vphi 0.0, %v603
      %v51 = vphi 0.0, %v604
      %v52 = vphi -inf, %v605
      %v53 = vphi -inf, %v606
    $region32: #{tpu_custom_call.1} parent=1 // loop_header_branch
      %46 = sbr.rel (%p44) target = $region36
    $region33: #{tpu_custom_call.1} parent=1 // loop_body
      %s54 = smul.u32 %s43, 6
      %s55 = smul.addr %s54, 2
      %s56 = scalar_lea.vmem %s0, %s55
      %v57 = vld [vmem:[%s56] sm:$0xff]
      %s58 = ssub.s32 7, %s43
      %s59 = smul.u32 %s58, 6
      %s60 = smul.addr %s59, 2
      %s61 = scalar_lea.vmem %s0, %s60
      %v62 = vld [vmem:[%s61] sm:$0xff]
      %v63 = vld [vmem:[%s61 + $0x8] sm:$0xf]
      %v64 = vpack.c.bf16 %v48, %v48
      %v65 = vld [vmem:[%s1] sm:$0xff]
      %v66 = vld [vmem:[%s1 + $0x8] sm:$0xf]
      %v67 = vld [vmem:[%s1 + $0xc] sm:$0xff]
      %v68 = vld [vmem:[%s1 + $0x14] sm:$0xf]
      %v69 = vld [vmem:[%s1 + $0x18] sm:$0xff]
      %v70 = vld [vmem:[%s1 + $0x20] sm:$0xf]
      %v71 = vld [vmem:[%s1 + $0x24] sm:$0xff]
      %v72 = vld [vmem:[%s1 + $0x2c] sm:$0xf]
      %v73 = vld [vmem:[%s1 + $0x30] sm:$0xff]
      %v74 = vld [vmem:[%s1 + $0x38] sm:$0xf]
      %v75 = vld [vmem:[%s1 + $0x3c] sm:$0xff]
      %v76 = vld [vmem:[%s1 + $0x44] sm:$0xf]
      %v77 = vld [vmem:[%s1 + $0x48] sm:$0xff]
      %v78 = vld [vmem:[%s1 + $0x50] sm:$0xf]
      %v79 = vld [vmem:[%s1 + $0x54] sm:$0xff]
      %v80 = vld [vmem:[%s1 + $0x5c] sm:$0xf]
      %v81 = vld [vmem:[%s1 + $0x60] sm:$0xff]
      %v82 = vld [vmem:[%s1 + $0x68] sm:$0xf]
      %v83 = vld [vmem:[%s1 + $0x6c] sm:$0xff]
      %v84 = vld [vmem:[%s1 + $0x74] sm:$0xf]
      %v85 = vld [vmem:[%s1 + $0x78] sm:$0xff]
      %v86 = vld [vmem:[%s1 + $0x80] sm:$0xf]
      %v87 = vld [vmem:[%s1 + $0x84] sm:$0xff]
      %v88 = vld [vmem:[%s1 + $0x8c] sm:$0xf]
      %v89 = vld [vmem:[%s1 + $0x90] sm:$0xff]
      %v90 = vld [vmem:[%s1 + $0x98] sm:$0xf]
      %v91 = vld [vmem:[%s1 + $0x9c] sm:$0xff]
      %v92 = vld [vmem:[%s1 + $0xa4] sm:$0xf]
      %v93 = vld [vmem:[%s1 + $0xa8] sm:$0xff]
      %v94 = vld [vmem:[%s1 + $0xb0] sm:$0xf]
      %v95 = vld [vmem:[%s1 + $0xb4] sm:$0xff]
      %v96 = vld [vmem:[%s1 + $0xbc] sm:$0xf]
      %v129 = vunpack.c.l.b16 %v65
      %v130 = vunpack.c.h.b16 %v65
      %v131 = vunpack.c.l.b16 %v66
      %v132 = vunpack.c.l.b16 %v67
      %v133 = vunpack.c.h.b16 %v67
      %v134 = vunpack.c.l.b16 %v68
      %v135 = vunpack.c.l.b16 %v69
      %v136 = vunpack.c.h.b16 %v69
      %v137 = vunpack.c.l.b16 %v70
      %v138 = vunpack.c.l.b16 %v71
      %v139 = vunpack.c.h.b16 %v71
      %v140 = vunpack.c.l.b16 %v72
      %v141 = vunpack.c.l.b16 %v73
      %v142 = vunpack.c.h.b16 %v73
      %v143 = vunpack.c.l.b16 %v74
      %v144 = vunpack.c.l.b16 %v75
      %v145 = vunpack.c.h.b16 %v75
      %v146 = vunpack.c.l.b16 %v76
      %v147 = vunpack.c.l.b16 %v77
      %v148 = vunpack.c.h.b16 %v77
      %v149 = vunpack.c.l.b16 %v78
      %v150 = vunpack.c.l.b16 %v79
      %v151 = vunpack.c.h.b16 %v79
      %v152 = vunpack.c.l.b16 %v80
      %v153 = vunpack.c.l.b16 %v81
      %v154 = vunpack.c.h.b16 %v81
      %v155 = vunpack.c.l.b16 %v82
      %v156 = vunpack.c.l.b16 %v83
      %v157 = vunpack.c.h.b16 %v83
      %v158 = vunpack.c.l.b16 %v84
      %v159 = vunpack.c.l.b16 %v85
      %v160 = vunpack.c.h.b16 %v85
      %v161 = vunpack.c.l.b16 %v86
      %v162 = vunpack.c.l.b16 %v87
      %v163 = vunpack.c.h.b16 %v87
      %v164 = vunpack.c.l.b16 %v88
      %v165 = vunpack.c.l.b16 %v89
      %v166 = vunpack.c.h.b16 %v89
      %v167 = vunpack.c.l.b16 %v90
      %v168 = vunpack.c.l.b16 %v91
      %v169 = vunpack.c.h.b16 %v91
      %v170 = vunpack.c.l.b16 %v92
      %v171 = vunpack.c.l.b16 %v93
      %v172 = vunpack.c.h.b16 %v93
      %v173 = vunpack.c.l.b16 %v94
      %v174 = vunpack.c.l.b16 %v95
      %v175 = vunpack.c.h.b16 %v95
      %v176 = vunpack.c.l.b16 %v96
      %v177 = vpack.c.b16 %v132, %v129
      %v178 = vpack.c.b16 %v133, %v130
      %v179 = vpack.c.b16 %v134, %v131
      %v180 = vpack.c.b16 %v138, %v135
      %v181 = vpack.c.b16 %v139, %v136
      %v182 = vpack.c.b16 %v140, %v137
      %v183 = vpack.c.b16 %v144, %v141
      %v184 = vpack.c.b16 %v145, %v142
      %v185 = vpack.c.b16 %v146, %v143
      %v186 = vpack.c.b16 %v150, %v147
      %v187 = vpack.c.b16 %v151, %v148
      %v188 = vpack.c.b16 %v152, %v149
      %v189 = vpack.c.b16 %v156, %v153
      %v190 = vpack.c.b16 %v157, %v154
      %v191 = vpack.c.b16 %v158, %v155
      %v192 = vpack.c.b16 %v162, %v159
      %v193 = vpack.c.b16 %v163, %v160
      %v194 = vpack.c.b16 %v164, %v161
      %v195 = vpack.c.b16 %v168, %v165
      %v196 = vpack.c.b16 %v169, %v166
      %v197 = vpack.c.b16 %v170, %v167
      %v198 = vpack.c.b16 %v174, %v171
      %v199 = vpack.c.b16 %v175, %v172
      %v200 = vpack.c.b16 %v176, %v173
      %225 = vmatprep.subr.bf16.mxu0 %v178
      %226 = vmatpush1.bf16.msra.mxu0 %v177
      %227 = vmatprep.subr.bf16.mxu0 %v181
      %228 = vmatpush1.bf16.msra.mxu0 %v180
      %229 = vmatprep.subr.bf16.mxu0 %v184
      %230 = vmatpush1.bf16.msra.mxu0 %v183
      %231 = vmatprep.subr.bf16.mxu0 %v187
      %232 = vmatpush1.bf16.msra.mxu0 %v186
      %233 = vmatprep.subr.bf16.mxu0 %v190
      %234 = vmatpush1.bf16.msra.mxu0 %v189
      %235 = vmatprep.subr.bf16.mxu0 %v193
      %236 = vmatpush1.bf16.msra.mxu0 %v192
      %237 = vmatprep.subr.bf16.mxu0 %v196
      %238 = vmatpush1.bf16.msra.mxu0 %v195
      %239 = vmatprep.subr.bf16.mxu0 %v199
      %240 = vmatpush1.bf16.msra.mxu0 %v198
      %241 = vmatprep.subr.bf16.mxu0 0
      %242 = vmatpush1.bf16.msra.mxu0 0
      %243 = vmatprep.subr.bf16.mxu0 0
      %244 = vmatpush1.bf16.msra.mxu0 0
      %245 = vmatprep.subr.bf16.mxu0 0
      %246 = vmatpush1.bf16.msra.mxu0 0
      %247 = vmatprep.subr.bf16.mxu0 0
      %248 = vmatpush1.bf16.msra.mxu0 0
      %249 = vmatprep.subr.bf16.mxu0 0
      %250 = vmatpush1.bf16.msra.mxu0 0
      %251 = vmatprep.subr.bf16.mxu0 0
      %252 = vmatpush1.bf16.msra.mxu0 0
      %253 = vmatprep.subr.bf16.mxu0 0
      %254 = vmatpush1.bf16.msra.mxu0 0
      %255 = vmatprep.subr.bf16.mxu0 0
      %256 = vmatpush1.bf16.msra.mxu0 0
      %257 = vmatprep.mubr.bf16.mxu0 0
      %258 = vmatmul.mubr.bf16.gmra.mrb[0].mxu0 %v64
      %v259 = vpop.f32.mrb[0].mxu0
      %v260 = vadd.f32 0.0, %v259
      %v261 = vpop.f32.mrb[0].mxu0
      %v262 = vadd.f32 0.0, %v261
      %v263 = vpop.f32.mrb[0].mxu0
      %v264 = vpop.f32.mrb[0].mxu0
      %265 = vdwg.mxu0
      %266 = vmatprep.subr.bf16.mxu0 0
      %267 = vmatpush1.bf16.msra.mxu0 %v179
      %268 = vmatprep.subr.bf16.mxu0 0
      %269 = vmatpush1.bf16.msra.mxu0 %v182
      %270 = vmatprep.subr.bf16.mxu0 0
      %271 = vmatpush1.bf16.msra.mxu0 %v185
      %272 = vmatprep.subr.bf16.mxu0 0
      %273 = vmatpush1.bf16.msra.mxu0 %v188
      %274 = vmatprep.subr.bf16.mxu0 0
      %275 = vmatpush1.bf16.msra.mxu0 %v191
      %276 = vmatprep.subr.bf16.mxu0 0
      %277 = vmatpush1.bf16.msra.mxu0 %v194
      %278 = vmatprep.subr.bf16.mxu0 0
      %279 = vmatpush1.bf16.msra.mxu0 %v197
      %280 = vmatprep.subr.bf16.mxu0 0
      %281 = vmatpush1.bf16.msra.mxu0 %v200
      %282 = vmatprep.subr.bf16.mxu0 0
      %283 = vmatpush1.bf16.msra.mxu0 0
      %284 = vmatprep.subr.bf16.mxu0 0
      %285 = vmatpush1.bf16.msra.mxu0 0
      %286 = vmatprep.subr.bf16.mxu0 0
      %287 = vmatpush1.bf16.msra.mxu0 0
      %288 = vmatprep.subr.bf16.mxu0 0
      %289 = vmatpush1.bf16.msra.mxu0 0
      %290 = vmatprep.subr.bf16.mxu0 0
      %291 = vmatpush1.bf16.msra.mxu0 0
      %292 = vmatprep.subr.bf16.mxu0 0
      %293 = vmatpush1.bf16.msra.mxu0 0
      %294 = vmatprep.subr.bf16.mxu0 0
      %295 = vmatpush1.bf16.msra.mxu0 0
      %296 = vmatprep.subr.bf16.mxu0 0
      %297 = vmatpush1.bf16.msra.mxu0 0
      %298 = vmatprep.mubr.bf16.mxu0 0
      %299 = vmatmul.mubr.bf16.gmra.mrb[0].mxu0 %v64
      %v300 = vpop.f32.mrb[0].mxu0
      %v301 = vadd.f32 0.0, %v300
      %v302 = vpop.f32.mrb[0].mxu0
      %v303 = vpop.f32.mrb[0].mxu0
      %v304 = vpop.f32.mrb[0].mxu0
      %305 = vdwg.mxu0
      %v306 = vadd.f32 %v57, %v260
      %v307 = vxor.u32 %v306, 2147483648
      %v308 = vmul.f32 %v307, 1.442695
      %v309 = vpow.pop %v308
      %v310 = vadd.f32 %v309, 1.0
      %v311 = vrcp.pop %v310
      %v312 = vmul.f32 1.0, %v311
      %v314 = vrot.slane %v57, 2
      %v316 = vadd.f32 %v314, %v262
      %v317 = vxor.u32 %v316, 2147483648
      %v318 = vmul.f32 %v317, 1.442695
      %v319 = vpow.pop %v318
      %v320 = vadd.f32 %v319, 1.0
      %v321 = vrcp.pop %v320
      %v322 = vmul.f32 1.0, %v321
      %v323 = vadd.f32 %v301, %v33
      %v324 = vmul.f32 %v312, %v323
      %v325 = vrot.slane %v57, 4
      %v327 = vadd.f32 %v325, %v324
      %v328 = vtanh.pop %v327
      %v329 = vsub.f32 1.0, %v322
      %v330 = vmul.f32 %v329, %v328
      %v331 = vmul.f32 %v322, %v48
      %v332 = vadd.f32 %v330, %v331
      %v333 = vpack.c.bf16 %v49, %v49
      %v334 = vld [vmem:[%s2] sm:$0xff]
      %v335 = vld [vmem:[%s2 + $0x8] sm:$0xf]
      %v336 = vld [vmem:[%s2 + $0xc] sm:$0xff]
      %v337 = vld [vmem:[%s2 + $0x14] sm:$0xf]
      %v338 = vld [vmem:[%s2 + $0x18] sm:$0xff]
      %v339 = vld [vmem:[%s2 + $0x20] sm:$0xf]
      %v340 = vld [vmem:[%s2 + $0x24] sm:$0xff]
      %v341 = vld [vmem:[%s2 + $0x2c] sm:$0xf]
      %v342 = vld [vmem:[%s2 + $0x30] sm:$0xff]
      %v343 = vld [vmem:[%s2 + $0x38] sm:$0xf]
      %v344 = vld [vmem:[%s2 + $0x3c] sm:$0xff]
      %v345 = vld [vmem:[%s2 + $0x44] sm:$0xf]
      %v346 = vld [vmem:[%s2 + $0x48] sm:$0xff]
      %v347 = vld [vmem:[%s2 + $0x50] sm:$0xf]
      %v348 = vld [vmem:[%s2 + $0x54] sm:$0xff]
      %v349 = vld [vmem:[%s2 + $0x5c] sm:$0xf]
      %v350 = vld [vmem:[%s2 + $0x60] sm:$0xff]
      %v351 = vld [vmem:[%s2 + $0x68] sm:$0xf]
      %v352 = vld [vmem:[%s2 + $0x6c] sm:$0xff]
      %v353 = vld [vmem:[%s2 + $0x74] sm:$0xf]
      %v354 = vld [vmem:[%s2 + $0x78] sm:$0xff]
      %v355 = vld [vmem:[%s2 + $0x80] sm:$0xf]
      %v356 = vld [vmem:[%s2 + $0x84] sm:$0xff]
      %v357 = vld [vmem:[%s2 + $0x8c] sm:$0xf]
      %v358 = vld [vmem:[%s2 + $0x90] sm:$0xff]
      %v359 = vld [vmem:[%s2 + $0x98] sm:$0xf]
      %v360 = vld [vmem:[%s2 + $0x9c] sm:$0xff]
      %v361 = vld [vmem:[%s2 + $0xa4] sm:$0xf]
      %v362 = vld [vmem:[%s2 + $0xa8] sm:$0xff]
      %v363 = vld [vmem:[%s2 + $0xb0] sm:$0xf]
      %v364 = vld [vmem:[%s2 + $0xb4] sm:$0xff]
      %v365 = vld [vmem:[%s2 + $0xbc] sm:$0xf]
      %v398 = vunpack.c.l.b16 %v334
      %v399 = vunpack.c.h.b16 %v334
      %v400 = vunpack.c.l.b16 %v335
      %v401 = vunpack.c.l.b16 %v336
      %v402 = vunpack.c.h.b16 %v336
      %v403 = vunpack.c.l.b16 %v337
      %v404 = vunpack.c.l.b16 %v338
      %v405 = vunpack.c.h.b16 %v338
      %v406 = vunpack.c.l.b16 %v339
      %v407 = vunpack.c.l.b16 %v340
      %v408 = vunpack.c.h.b16 %v340
      %v409 = vunpack.c.l.b16 %v341
      %v410 = vunpack.c.l.b16 %v342
      %v411 = vunpack.c.h.b16 %v342
      %v412 = vunpack.c.l.b16 %v343
      %v413 = vunpack.c.l.b16 %v344
      %v414 = vunpack.c.h.b16 %v344
      %v415 = vunpack.c.l.b16 %v345
      %v416 = vunpack.c.l.b16 %v346
      %v417 = vunpack.c.h.b16 %v346
      %v418 = vunpack.c.l.b16 %v347
      %v419 = vunpack.c.l.b16 %v348
      %v420 = vunpack.c.h.b16 %v348
      %v421 = vunpack.c.l.b16 %v349
      %v422 = vunpack.c.l.b16 %v350
      %v423 = vunpack.c.h.b16 %v350
      %v424 = vunpack.c.l.b16 %v351
      %v425 = vunpack.c.l.b16 %v352
      %v426 = vunpack.c.h.b16 %v352
      %v427 = vunpack.c.l.b16 %v353
      %v428 = vunpack.c.l.b16 %v354
      %v429 = vunpack.c.h.b16 %v354
      %v430 = vunpack.c.l.b16 %v355
      %v431 = vunpack.c.l.b16 %v356
      %v432 = vunpack.c.h.b16 %v356
      %v433 = vunpack.c.l.b16 %v357
      %v434 = vunpack.c.l.b16 %v358
      %v435 = vunpack.c.h.b16 %v358
      %v436 = vunpack.c.l.b16 %v359
      %v437 = vunpack.c.l.b16 %v360
      %v438 = vunpack.c.h.b16 %v360
      %v439 = vunpack.c.l.b16 %v361
      %v440 = vunpack.c.l.b16 %v362
      %v441 = vunpack.c.h.b16 %v362
      %v442 = vunpack.c.l.b16 %v363
      %v443 = vunpack.c.l.b16 %v364
      %v444 = vunpack.c.h.b16 %v364
      %v445 = vunpack.c.l.b16 %v365
      %v446 = vpack.c.b16 %v401, %v398
      %v447 = vpack.c.b16 %v402, %v399
      %v448 = vpack.c.b16 %v403, %v400
      %v449 = vpack.c.b16 %v407, %v404
      %v450 = vpack.c.b16 %v408, %v405
      %v451 = vpack.c.b16 %v409, %v406
      %v452 = vpack.c.b16 %v413, %v410
      %v453 = vpack.c.b16 %v414, %v411
      %v454 = vpack.c.b16 %v415, %v412
      %v455 = vpack.c.b16 %v419, %v416
      %v456 = vpack.c.b16 %v420, %v417
      %v457 = vpack.c.b16 %v421, %v418
      %v458 = vpack.c.b16 %v425, %v422
      %v459 = vpack.c.b16 %v426, %v423
      %v460 = vpack.c.b16 %v427, %v424
      %v461 = vpack.c.b16 %v431, %v428
      %v462 = vpack.c.b16 %v432, %v429
      %v463 = vpack.c.b16 %v433, %v430
      %v464 = vpack.c.b16 %v437, %v434
      %v465 = vpack.c.b16 %v438, %v435
      %v466 = vpack.c.b16 %v439, %v436
      %v467 = vpack.c.b16 %v443, %v440
      %v468 = vpack.c.b16 %v444, %v441
      %v469 = vpack.c.b16 %v445, %v442
      %494 = vmatprep.subr.bf16.mxu0 %v447
      %495 = vmatpush1.bf16.msra.mxu0 %v446
      %496 = vmatprep.subr.bf16.mxu0 %v450
      %497 = vmatpush1.bf16.msra.mxu0 %v449
      %498 = vmatprep.subr.bf16.mxu0 %v453
      %499 = vmatpush1.bf16.msra.mxu0 %v452
      %500 = vmatprep.subr.bf16.mxu0 %v456
      %501 = vmatpush1.bf16.msra.mxu0 %v455
      %502 = vmatprep.subr.bf16.mxu0 %v459
      %503 = vmatpush1.bf16.msra.mxu0 %v458
      %504 = vmatprep.subr.bf16.mxu0 %v462
      %505 = vmatpush1.bf16.msra.mxu0 %v461
      %506 = vmatprep.subr.bf16.mxu0 %v465
      %507 = vmatpush1.bf16.msra.mxu0 %v464
      %508 = vmatprep.subr.bf16.mxu0 %v468
      %509 = vmatpush1.bf16.msra.mxu0 %v467
      %510 = vmatprep.subr.bf16.mxu0 0
      %511 = vmatpush1.bf16.msra.mxu0 0
      %512 = vmatprep.subr.bf16.mxu0 0
      %513 = vmatpush1.bf16.msra.mxu0 0
      %514 = vmatprep.subr.bf16.mxu0 0
      %515 = vmatpush1.bf16.msra.mxu0 0
      %516 = vmatprep.subr.bf16.mxu0 0
      %517 = vmatpush1.bf16.msra.mxu0 0
      %518 = vmatprep.subr.bf16.mxu0 0
      %519 = vmatpush1.bf16.msra.mxu0 0
      %520 = vmatprep.subr.bf16.mxu0 0
      %521 = vmatpush1.bf16.msra.mxu0 0
      %522 = vmatprep.subr.bf16.mxu0 0
      %523 = vmatpush1.bf16.msra.mxu0 0
      %524 = vmatprep.subr.bf16.mxu0 0
      %525 = vmatpush1.bf16.msra.mxu0 0
      %526 = vmatprep.mubr.bf16.mxu0 0
      %527 = vmatmul.mubr.bf16.gmra.mrb[0].mxu0 %v333
      %v528 = vpop.f32.mrb[0].mxu0
      %v529 = vadd.f32 0.0, %v528
      %v530 = vpop.f32.mrb[0].mxu0
      %v531 = vadd.f32 0.0, %v530
      %v532 = vpop.f32.mrb[0].mxu0
      %v533 = vpop.f32.mrb[0].mxu0
      %534 = vdwg.mxu0
      %535 = vmatprep.subr.bf16.mxu0 0
      %536 = vmatpush1.bf16.msra.mxu0 %v448
      %537 = vmatprep.subr.bf16.mxu0 0
      %538 = vmatpush1.bf16.msra.mxu0 %v451
      %539 = vmatprep.subr.bf16.mxu0 0
      %540 = vmatpush1.bf16.msra.mxu0 %v454
      %541 = vmatprep.subr.bf16.mxu0 0
      %542 = vmatpush1.bf16.msra.mxu0 %v457
      %543 = vmatprep.subr.bf16.mxu0 0
      %544 = vmatpush1.bf16.msra.mxu0 %v460
      %545 = vmatprep.subr.bf16.mxu0 0
      %546 = vmatpush1.bf16.msra.mxu0 %v463
      %547 = vmatprep.subr.bf16.mxu0 0
      %548 = vmatpush1.bf16.msra.mxu0 %v466
      %549 = vmatprep.subr.bf16.mxu0 0
      %550 = vmatpush1.bf16.msra.mxu0 %v469
      %551 = vmatprep.subr.bf16.mxu0 0
      %552 = vmatpush1.bf16.msra.mxu0 0
      %553 = vmatprep.subr.bf16.mxu0 0
      %554 = vmatpush1.bf16.msra.mxu0 0
      %555 = vmatprep.subr.bf16.mxu0 0
      %556 = vmatpush1.bf16.msra.mxu0 0
      %557 = vmatprep.subr.bf16.mxu0 0
      %558 = vmatpush1.bf16.msra.mxu0 0
      %559 = vmatprep.subr.bf16.mxu0 0
      %560 = vmatpush1.bf16.msra.mxu0 0
      %561 = vmatprep.subr.bf16.mxu0 0
      %562 = vmatpush1.bf16.msra.mxu0 0
      %563 = vmatprep.subr.bf16.mxu0 0
      %564 = vmatpush1.bf16.msra.mxu0 0
      %565 = vmatprep.subr.bf16.mxu0 0
      %566 = vmatpush1.bf16.msra.mxu0 0
      %567 = vmatprep.mubr.bf16.mxu0 0
      %568 = vmatmul.mubr.bf16.gmra.mrb[0].mxu0 %v333
      %v569 = vpop.f32.mrb[0].mxu0
      %v570 = vadd.f32 0.0, %v569
      %v571 = vpop.f32.mrb[0].mxu0
      %v572 = vpop.f32.mrb[0].mxu0
      %v573 = vpop.f32.mrb[0].mxu0
      %574 = vdwg.mxu0
      %v576 = vrot.slane %v62, 6
      %v578 = vadd.f32 %v576, %v529
      %v579 = vxor.u32 %v578, 2147483648
      %v580 = vmul.f32 %v579, 1.442695
      %v581 = vpow.pop %v580
      %v582 = vadd.f32 %v581, 1.0
      %v583 = vrcp.pop %v582
      %v584 = vmul.f32 1.0, %v583
      %v585 = vadd.f32 %v63, %v531
      %v586 = vxor.u32 %v585, 2147483648
      %v587 = vmul.f32 %v586, 1.442695
      %v588 = vpow.pop %v587
      %v589 = vadd.f32 %v588, 1.0
      %v590 = vrcp.pop %v589
      %v591 = vmul.f32 1.0, %v590
      %v592 = vadd.f32 %v570, %v40
      %v593 = vmul.f32 %v584, %v592
      %v595 = vrot.slane %v63, 2
      %v597 = vadd.f32 %v595, %v593
      %v598 = vtanh.pop %v597
      %v599 = vsub.f32 1.0, %v591
      %v600 = vmul.f32 %v599, %v598
      %v601 = vmul.f32 %v591, %v49
      %v602 = vadd.f32 %v600, %v601
      %v603 = vadd.f32 %v50, %v332
      %v604 = vadd.f32 %v51, %v602
      %v605 = vmax.f32 %v52, %v332
      %v606 = vmax.f32 %v53, %v602
    $region34: #{tpu_custom_call.1} parent=1 // loop_footer
      %s47 = sadd.s32 1, %s43
    $region35: #{tpu_custom_call.1} parent=1 // loop_footer_branch
      %42 = sbr.rel target = $region31
    $region36: #{tpu_custom_call.1} parent=1 // loop_exit
      _
    %v607 = vmul.f32 %v50, 0.125
    %v608 = vmul.f32 %v51, 0.125
    %v609 = vld [vmem:[%s5] sm:$0xff]
    %v610 = vld [vmem:[%s5 + $0x8] sm:$0xff]
    %v611 = vld [vmem:[%s5 + $0x10] sm:$0xff]
    %v612 = vld [vmem:[%s5 + $0x18] sm:$0xff]
    %v613 = vld [vmem:[%s5 + $0x20] sm:$0xff]
    %v614 = vld [vmem:[%s5 + $0x28] sm:$0xff]
    %v615 = vld [vmem:[%s5 + $0x30] sm:$0xff]
    %v616 = vld [vmem:[%s5 + $0x38] sm:$0xff]
    %v617 = vld [vmem:[%s5 + $0x40] sm:$0xff]
    %v618 = vld [vmem:[%s5 + $0x48] sm:$0xff]
    %v619 = vld [vmem:[%s5 + $0x50] sm:$0xff]
    %v620 = vld [vmem:[%s5 + $0x58] sm:$0xff]
    %v621 = vld [vmem:[%s5 + $0x60] sm:$0xff]
    %v622 = vld [vmem:[%s5 + $0x68] sm:$0xff]
    %v623 = vld [vmem:[%s5 + $0x70] sm:$0xff]
    %v624 = vld [vmem:[%s5 + $0x78] sm:$0xff]
    %v625 = vld [vmem:[%s5 + $0x80] sm:$0xff]
    %v626 = vld [vmem:[%s5 + $0x88] sm:$0xff]
    %v627 = vld [vmem:[%s5 + $0x90] sm:$0xff]
    %v628 = vld [vmem:[%s5 + $0x98] sm:$0xff]
    %v629 = vld [vmem:[%s5 + $0xa0] sm:$0xff]
    %v630 = vld [vmem:[%s5 + $0xa8] sm:$0xff]
    %v631 = vld [vmem:[%s5 + $0xb0] sm:$0xff]
    %v632 = vld [vmem:[%s5 + $0xb8] sm:$0xff]
    %v633 = vld [vmem:[%s5 + $0xc0] sm:$0xff]
    %v634 = vld [vmem:[%s5 + $0xc8] sm:$0xff]
    %v635 = vld [vmem:[%s5 + $0xd0] sm:$0xff]
    %v636 = vld [vmem:[%s5 + $0xd8] sm:$0xff]
    %v637 = vld [vmem:[%s5 + $0xe0] sm:$0xff]
    %v638 = vld [vmem:[%s5 + $0xe8] sm:$0xff]
    %v639 = vld [vmem:[%s5 + $0xf0] sm:$0xff]
    %v640 = vld [vmem:[%s5 + $0xf8] sm:$0xff]
    %v641 = vld [vmem:[%s5 + $0x100] sm:$0xff]
    %v642 = vld [vmem:[%s5 + $0x108] sm:$0xff]
    %v643 = vld [vmem:[%s5 + $0x110] sm:$0xff]
    %v644 = vld [vmem:[%s5 + $0x118] sm:$0xff]
    %v645 = vld [vmem:[%s5 + $0x120] sm:$0xff]
    %v646 = vld [vmem:[%s5 + $0x128] sm:$0xff]
    %v647 = vld [vmem:[%s5 + $0x130] sm:$0xff]
    %v648 = vld [vmem:[%s5 + $0x138] sm:$0xff]
    %v649 = vld [vmem:[%s5 + $0x140] sm:$0xff]
    %v650 = vld [vmem:[%s5 + $0x148] sm:$0xff]
    %v651 = vld [vmem:[%s5 + $0x150] sm:$0xff]
    %v652 = vld [vmem:[%s5 + $0x158] sm:$0xff]
    %v653 = vld [vmem:[%s5 + $0x160] sm:$0xff]
    %v654 = vld [vmem:[%s5 + $0x168] sm:$0xff]
    %v655 = vld [vmem:[%s5 + $0x170] sm:$0xff]
    %v656 = vld [vmem:[%s5 + $0x178] sm:$0xff]
    %v657 = vld [vmem:[%s5 + $0x180] sm:$0xff]
    %v658 = vld [vmem:[%s5 + $0x188] sm:$0xff]
    %v659 = vld [vmem:[%s5 + $0x190] sm:$0xff]
    %v660 = vld [vmem:[%s5 + $0x198] sm:$0xff]
    %v661 = vld [vmem:[%s5 + $0x1a0] sm:$0xff]
    %v662 = vld [vmem:[%s5 + $0x1a8] sm:$0xff]
    %v663 = vld [vmem:[%s5 + $0x1b0] sm:$0xff]
    %v664 = vld [vmem:[%s5 + $0x1b8] sm:$0xff]
    %v665 = vld [vmem:[%s5 + $0x1c0] sm:$0xff]
    %v666 = vld [vmem:[%s5 + $0x1c8] sm:$0xff]
    %v667 = vld [vmem:[%s5 + $0x1d0] sm:$0xff]
    %v668 = vld [vmem:[%s5 + $0x1d8] sm:$0xff]
    %v669 = vld [vmem:[%s5 + $0x1e0] sm:$0xff]
    %v670 = vld [vmem:[%s5 + $0x1e8] sm:$0xff]
    %v671 = vld [vmem:[%s5 + $0x1f0] sm:$0xff]
    %v672 = vld [vmem:[%s5 + $0x1f8] sm:$0xff]
    %v673 = vld [vmem:[%s6] sm:$0x1]
    %v675 = vlaneseq
    %v676 = vshrl.u32 %v675, 7
    %v677 = vsub.s32 0, %v676
    %v678 = vrot.slane %v673, %v677
    %680 = vmatprep.subr.mxu0 0.0
    %681 = vmatpush1.msra.mxu0 %v609
    %682 = vmatprep.subr.mxu0 0.0
    %683 = vmatpush1.msra.mxu0 %v610
    %684 = vmatprep.subr.mxu0 0.0
    %685 = vmatpush1.msra.mxu0 %v611
    %686 = vmatprep.subr.mxu0 0.0
    %687 = vmatpush1.msra.mxu0 %v612
    %688 = vmatprep.subr.mxu0 0.0
    %689 = vmatpush1.msra.mxu0 %v613
    %690 = vmatprep.subr.mxu0 0.0
    %691 = vmatpush1.msra.mxu0 %v614
    %692 = vmatprep.subr.mxu0 0.0
    %693 = vmatpush1.msra.mxu0 %v615
    %694 = vmatprep.subr.mxu0 0.0
    %695 = vmatpush1.msra.mxu0 %v616
    %696 = vmatprep.subr.mxu0 0.0
    %697 = vmatpush1.msra.mxu0 %v617
    %698 = vmatprep.subr.mxu0 0.0
    %699 = vmatpush1.msra.mxu0 %v618
    %700 = vmatprep.subr.mxu0 0.0
    %701 = vmatpush1.msra.mxu0 %v619
    %702 = vmatprep.subr.mxu0 0.0
    %703 = vmatpush1.msra.mxu0 %v620
    %704 = vmatprep.subr.mxu0 0.0
    %705 = vmatpush1.msra.mxu0 %v621
    %706 = vmatprep.subr.mxu0 0.0
    %707 = vmatpush1.msra.mxu0 %v622
    %708 = vmatprep.subr.mxu0 0.0
    %709 = vmatpush1.msra.mxu0 %v623
    %710 = vmatprep.subr.mxu0 0.0
    %711 = vmatpush1.msra.mxu0 %v624
    %712 = vmatprep.subr.mxu0 0.0
    %713 = vmatpush1.msra.mxu0 %v625
    %714 = vmatprep.subr.mxu0 0.0
    %715 = vmatpush1.msra.mxu0 %v626
    %716 = vmatprep.subr.mxu0 0.0
    %717 = vmatpush1.msra.mxu0 %v627
    %718 = vmatprep.subr.mxu0 0.0
    %719 = vmatpush1.msra.mxu0 %v628
    %720 = vmatprep.subr.mxu0 0.0
    %721 = vmatpush1.msra.mxu0 %v629
    %722 = vmatprep.subr.mxu0 0.0
    %723 = vmatpush1.msra.mxu0 %v630
    %724 = vmatprep.subr.mxu0 0.0
    %725 = vmatpush1.msra.mxu0 %v631
    %726 = vmatprep.subr.mxu0 0.0
    %727 = vmatpush1.msra.mxu0 %v632
    %728 = vmatprep.subr.mxu0 0.0
    %729 = vmatpush1.msra.mxu0 %v633
    %730 = vmatprep.subr.mxu0 0.0
    %731 = vmatpush1.msra.mxu0 %v634
    %732 = vmatprep.subr.mxu0 0.0
    %733 = vmatpush1.msra.mxu0 %v635
    %734 = vmatprep.subr.mxu0 0.0
    %735 = vmatpush1.msra.mxu0 %v636
    %736 = vmatprep.subr.mxu0 0.0
    %737 = vmatpush1.msra.mxu0 %v637
    %738 = vmatprep.subr.mxu0 0.0
    %739 = vmatpush1.msra.mxu0 %v638
    %740 = vmatprep.subr.mxu0 0.0
    %741 = vmatpush1.msra.mxu0 %v639
    %742 = vmatprep.subr.mxu0 0.0
    %743 = vmatpush1.msra.mxu0 %v640
    %744 = vmatprep.mubr.f32.mxu0 %v608
    %745 = vmatmul.mubr.f32.gmra.mrb[0].mxu0 %v607
    %v746 = vpop.f32.mrb[0].mxu0
    %v747 = vadd.f32 %v678, %v746
    %v748 = vpop.f32.mrb[0].mxu0
    %749 = vdwg.mxu0
    %750 = vmatprep.subr.mxu0 0.0
    %751 = vmatpush1.msra.mxu0 %v641
    %752 = vmatprep.subr.mxu0 0.0
    %753 = vmatpush1.msra.mxu0 %v642
    %754 = vmatprep.subr.mxu0 0.0
    %755 = vmatpush1.msra.mxu0 %v643
    %756 = vmatprep.subr.mxu0 0.0
    %757 = vmatpush1.msra.mxu0 %v644
    %758 = vmatprep.subr.mxu0 0.0
    %759 = vmatpush1.msra.mxu0 %v645
    %760 = vmatprep.subr.mxu0 0.0
    %761 = vmatpush1.msra.mxu0 %v646
    %762 = vmatprep.subr.mxu0 0.0
    %763 = vmatpush1.msra.mxu0 %v647
    %764 = vmatprep.subr.mxu0 0.0
    %765 = vmatpush1.msra.mxu0 %v648
    %766 = vmatprep.subr.mxu0 0.0
    %767 = vmatpush1.msra.mxu0 %v649
    %768 = vmatprep.subr.mxu0 0.0
    %769 = vmatpush1.msra.mxu0 %v650
    %770 = vmatprep.subr.mxu0 0.0
    %771 = vmatpush1.msra.mxu0 %v651
    %772 = vmatprep.subr.mxu0 0.0
    %773 = vmatpush1.msra.mxu0 %v652
    %774 = vmatprep.subr.mxu0 0.0
    %775 = vmatpush1.msra.mxu0 %v653
    %776 = vmatprep.subr.mxu0 0.0
    %777 = vmatpush1.msra.mxu0 %v654
    %778 = vmatprep.subr.mxu0 0.0
    %779 = vmatpush1.msra.mxu0 %v655
    %780 = vmatprep.subr.mxu0 0.0
    %781 = vmatpush1.msra.mxu0 %v656
    %782 = vmatprep.subr.mxu0 0.0
    %783 = vmatpush1.msra.mxu0 %v657
    %784 = vmatprep.subr.mxu0 0.0
    %785 = vmatpush1.msra.mxu0 %v658
    %786 = vmatprep.subr.mxu0 0.0
    %787 = vmatpush1.msra.mxu0 %v659
    %788 = vmatprep.subr.mxu0 0.0
    %789 = vmatpush1.msra.mxu0 %v660
    %790 = vmatprep.subr.mxu0 0.0
    %791 = vmatpush1.msra.mxu0 %v661
    %792 = vmatprep.subr.mxu0 0.0
    %793 = vmatpush1.msra.mxu0 %v662
    %794 = vmatprep.subr.mxu0 0.0
    %795 = vmatpush1.msra.mxu0 %v663
    %796 = vmatprep.subr.mxu0 0.0
    %797 = vmatpush1.msra.mxu0 %v664
    %798 = vmatprep.subr.mxu0 0.0
    %799 = vmatpush1.msra.mxu0 %v665
    %800 = vmatprep.subr.mxu0 0.0
    %801 = vmatpush1.msra.mxu0 %v666
    %802 = vmatprep.subr.mxu0 0.0
    %803 = vmatpush1.msra.mxu0 %v667
    %804 = vmatprep.subr.mxu0 0.0
    %805 = vmatpush1.msra.mxu0 %v668
    %806 = vmatprep.subr.mxu0 0.0
    %807 = vmatpush1.msra.mxu0 %v669
    %808 = vmatprep.subr.mxu0 0.0
    %809 = vmatpush1.msra.mxu0 %v670
    %810 = vmatprep.subr.mxu0 0.0
    %811 = vmatpush1.msra.mxu0 %v671
    %812 = vmatprep.subr.mxu0 0.0
    %813 = vmatpush1.msra.mxu0 %v672
    %814 = vmatprep.mubr.f32.mxu0 %v53
    %815 = vmatmul.mubr.f32.gmra.mrb[0].mxu0 %v52
    %v816 = vpop.f32.mrb[0].mxu0
    %v817 = vadd.f32 %v747, %v816
    %v818 = vpop.f32.mrb[0].mxu0
    %819 = vdwg.mxu0
    %vm820 = vcmask 25600
    %821 = vst.msk [vmem:[#allocation2] sm:$0x3] %vm820, %v817
    // Predicated region
    $region37: #{tpu_custom_call.1} parent=1 // pred_check
      _
    $region38: #{tpu_custom_call.1} parent=1 // pred_check_branch
      %823 = sbr.rel (0) target = $region40
    $region39: #{tpu_custom_call.1} parent=1 // pred_region
      %s825 = ssub.s32 32, 32
      %826 = vsyncadd [#allocation3], %s825
      %s828 = sshll.u32 [#allocation2], 4
      %s829 = int_to_ptr.vmem [resolvable:$true] %s828
      %831 = dma.vmem_to_hbm [thread:$0]  %s829, 32, %s7, [#allocation3]
    $region40: #{tpu_custom_call.1} parent=1 // pred_fallthru
      _
    // Predicated region
    $region41: #{tpu_custom_call.1} parent=1 // pred_check
      _
    $region42: #{tpu_custom_call.1} parent=1 // pred_check_branch
      %833 = sbr.rel (0) target = $region44
    $region43: #{tpu_custom_call.1} parent=1 // pred_region
      %834 = dma.done [#allocation3], 32
    $region44: #{tpu_custom_call.1} parent=1 // pred_fallthru
      _
    %835 = vsyncpa [#allocation3], 1

</llo_original>
